<compile_context>
chip_gen: v6e
topology: v6e:2x2x1
jax: 0.10.0
libtpu: 0.0.40
codegen_flags: <defaults>
</compile_context>

<pallas_src>
import functools

import jax
import jax.numpy as jnp
import numpy as np
from jax.experimental import pallas as pl
from jax.experimental.pallas import tpu as pltpu


def _focal_kernel(x_ref, t_ref, out_ref, acc_ref, *, alpha, gamma, n_valid,
                  block_rows, needs_mask):
    k = pl.program_id(1)

    @pl.when(k == 0)
    def _():
        acc_ref[...] = jnp.zeros_like(acc_ref)

    x = x_ref[...].astype(jnp.float32)
    t = t_ref[...].astype(jnp.float32)

    # s = (1 - 2t) * x   (== x for t==0, -x for t==1), so |s| == |x|.
    s = (1.0 - 2.0 * t) * x
    e = jnp.exp(-jnp.abs(x))                 # single transcendental, reused
    # Numerically stable BCE-with-logits: max(x,0) - x*t + log1p(exp(-|x|))
    bce = jnp.maximum(s, 0.0) + jnp.log1p(e)
    # pt = exp(-bce) = exp(-relu(s)) / (1 + e);  exp(-relu(s)) = e if s>0 else 1
    pt = jnp.where(s > 0.0, e, 1.0) / (1.0 + e)

    # at = alpha_vec.gather(0, targets) with alpha_vec = [alpha, 1 - alpha]
    at = jnp.where(t > 0.5, jnp.float32(1.0 - alpha), jnp.float32(alpha))

    one_m_pt = 1.0 - pt
    if gamma == 2:
        focal = one_m_pt * one_m_pt              # pure VPU multiplies
    elif isinstance(gamma, int):
        focal = one_m_pt ** gamma                # integer pow -> multiplies
    else:
        # Non-integer gamma (allowed by the PyTorch module): float pow lowers
        # through exp/log on the EUP, but semantics are preserved.
        focal = one_m_pt ** jnp.float32(gamma)

    f_loss = at * focal * bce

    if needs_mask:
        # Zero out padded elements (only emitted when padding was needed).
        row_ids = jax.lax.broadcasted_iota(jnp.int32, f_loss.shape, 0)
        col_ids = jax.lax.broadcasted_iota(jnp.int32, f_loss.shape, 1)
        base = (pl.program_id(0) * pl.num_programs(1) + k) * block_rows
        flat = (base + row_ids) * 128 + col_ids
        f_loss = jnp.where(flat < n_valid, f_loss, 0.0)

    # Lane-shaped accumulation: elementwise VPU adds only in the steady state.
    partial = jnp.sum(f_loss.reshape(block_rows // 8, 8, 128), axis=0)
    acc_ref[...] += partial

    @pl.when(k == pl.num_programs(1) - 1)
    def _():
        # One sublane (XLU) reduce per split, deferred to the final step.
        out_ref[...] = jnp.sum(acc_ref[...], axis=0, keepdims=True)


def weighted_focal_loss(inputs, targets, alpha=1.0, gamma=2,
                        block_rows=512, n_splits=2):
    """Mean weighted focal loss over all elements of `inputs`/`targets`.

    inputs/targets may be any shape (they are flattened, like the PyTorch
    module's elementwise BCE + .mean()); targets hold binary values {0, 1}.
    Narrower dtypes (e.g. bf16) are accepted and cast inside the kernel.
    """
    x = inputs.reshape(-1)
    t = targets.reshape(-1)
    n = x.shape[0]

    rows = pl.cdiv(n, 128)
    # Tile rows: multiple of 8, at least 8, no larger than (padded) rows.
    block_rows = max(8, min(int(block_rows), ((rows + 7) // 8) * 8))
    block_rows = (block_rows // 8) * 8

    n_blocks = pl.cdiv(rows, block_rows)
    # Leading parallel axis: lets v7x's 2 TensorCores split the work.
    n_splits = max(1, min(int(n_splits), n_blocks))
    steps = pl.cdiv(n_blocks, n_splits)

    padded_rows = steps * n_splits * block_rows
    padded_n = padded_rows * 128
    needs_mask = padded_n != n
    if needs_mask:
        pad = padded_n - n
        x = jnp.pad(x, (0, pad))
        t = jnp.pad(t, (0, pad))

    x2 = x.reshape(padded_rows, 128)
    t2 = t.reshape(padded_rows, 128)

    # Preserve non-integer gamma instead of silently truncating it.
    gamma_static = int(gamma) if float(gamma) == int(gamma) else float(gamma)

    kernel = functools.partial(
        _focal_kernel,
        alpha=float(alpha),
        gamma=gamma_static,
        n_valid=n,
        block_rows=block_rows,
        needs_mask=needs_mask,
    )

    # Explicit VMEM budget: 2 inputs x 2 pipeline buffers x tile, plus headroom.
    tile_bytes = block_rows * 128 * 4
    vmem_limit = max(32 * 1024 * 1024, 4 * tile_bytes + (2 << 20))

    partial = pl.pallas_call(
        kernel,
        out_shape=jax.ShapeDtypeStruct((n_splits, 128), jnp.float32),
        grid=(n_splits, steps),
        in_specs=[
            pl.BlockSpec((block_rows, 128), lambda s, k: (s * steps + k, 0)),
            pl.BlockSpec((block_rows, 128), lambda s, k: (s * steps + k, 0)),
        ],
        out_specs=pl.BlockSpec((1, 128), lambda s, k: (s, 0)),
        scratch_shapes=[pltpu.VMEM((8, 128), jnp.float32)],
        compiler_params=pltpu.CompilerParams(
            dimension_semantics=("parallel", "arbitrary"),
            vmem_limit_bytes=int(vmem_limit),
        ),
    )(x2, t2)

    # Finish the reduction (tiny: n_splits x 128 elements) and the mean in XLA.
    return jnp.sum(partial) / jnp.float32(n)


def _reference(inputs, targets, alpha=1.0, gamma=2):
    x = inputs.reshape(-1).astype(jnp.float32)
    t = targets.reshape(-1).astype(jnp.float32)
    bce = jnp.maximum(x, 0.0) - x * t + jnp.log1p(jnp.exp(-jnp.abs(x)))
    at = jnp.where(t > 0.5, 1.0 - alpha, alpha)
    pt = jnp.exp(-bce)
    return jnp.mean(at * (1.0 - pt) ** gamma * bce)


if __name__ == "__main__":
    key = jax.random.PRNGKey(0)
    k1, k2, k3, k4 = jax.random.split(key, 4)

    ALPHA = 0.25   # module default is 1.0; 0.25 keeps both branches non-trivial
    GAMMA = 2

    # Shapes consistent with the module: batch=2, channels=4, spatial=16x16.
    logits = jax.random.normal(k1, (2, 4, 16, 16), dtype=jnp.float32)
    targets = jax.random.bernoulli(k2, 0.3, (2, 4, 16, 16)).astype(jnp.float32)

    loss = jax.block_until_ready(
        weighted_focal_loss(logits, targets, alpha=ALPHA, gamma=GAMMA))
    ref = jax.block_until_ready(
        _reference(logits, targets, alpha=ALPHA, gamma=GAMMA))
    assert np.allclose(np.asarray(loss), np.asarray(ref), rtol=1e-5, atol=1e-6), (
        float(loss), float(ref))

    # Ragged N (not a multiple of 128) exercises the padding + masking path.
    logits_r = jax.random.normal(k3, (1000,), dtype=jnp.float32)
    targets_r = jax.random.bernoulli(k4, 0.3, (1000,)).astype(jnp.float32)
    loss_r = jax.block_until_ready(
        weighted_focal_loss(logits_r, targets_r, alpha=ALPHA, gamma=GAMMA))
    ref_r = jax.block_until_ready(
        _reference(logits_r, targets_r, alpha=ALPHA, gamma=GAMMA))
    assert np.allclose(np.asarray(loss_r), np.asarray(ref_r),
                       rtol=1e-5, atol=1e-6), (float(loss_r), float(ref_r))

    print("KERNEL_OK")
</pallas_src>

<mosaic_0001>
module attributes {stable_mosaic.version = 11 : i64} {
  func.func @_focal_kernel(%arg0: i32, %arg1: i32, %arg2: memref<16x128xf32, #tpu.memory_space<vmem>>, %arg3: memref<16x128xf32, #tpu.memory_space<vmem>>, %arg4: memref<1x128xf32, #tpu.memory_space<vmem>>, %arg5: memref<8x128xf32, #tpu.memory_space<vmem>>) attributes {dimension_semantics = [#tpu.dimension_semantics<parallel>, #tpu.dimension_semantics<arbitrary>], iteration_bounds = array<i64: 1, 1>, scalar_prefetch = 0 : i64, scratch_operands = 1 : i64, tpu.core_type = #tpu.core_type<tc>, window_params = [{transform_indices = @transform_0, window_bounds = array<i64: 16, 128>}, {transform_indices = @transform_1, window_bounds = array<i64: 16, 128>}, {transform_indices = @transform_2, window_bounds = array<i64: 1, 128>}]} {
    %c0_i32 = arith.constant 0 : i32
    %0 = arith.cmpi eq, %arg1, %c0_i32 : i32
    %1 = arith.extui %0 : i1 to i32
    %c0_i32_0 = arith.constant 0 : i32
    %2 = arith.cmpi ne, %1, %c0_i32_0 : i32
    scf.if %2 {
      %cst_21 = arith.constant 0.000000e+00 : f32
      %43 = vector.broadcast %cst_21 : f32 to vector<8x128xf32>
      %c0_22 = arith.constant 0 : index
      %c0_23 = arith.constant 0 : index
      %44 = vector.load %arg5[%c0_22, %c0_23] : memref<8x128xf32, #tpu.memory_space<vmem>>, vector<8x128xf32>
      tpu.vector_store %arg5[%c0_22, %c0_23], %43 {strides = array<i32>} : memref<8x128xf32, #tpu.memory_space<vmem>>, vector<8x128xf32>,
    } else {
    }
    %c0 = arith.constant 0 : index
    %c0_1 = arith.constant 0 : index
    %3 = vector.load %arg2[%c0, %c0_1] : memref<16x128xf32, #tpu.memory_space<vmem>>, vector<16x128xf32>
    %c0_2 = arith.constant 0 : index
    %c0_3 = arith.constant 0 : index
    %4 = vector.load %arg3[%c0_2, %c0_3] : memref<16x128xf32, #tpu.memory_space<vmem>>, vector<16x128xf32>
    %cst = arith.constant 2.000000e+00 : f32
    %5 = vector.broadcast %cst : f32 to vector<16x128xf32>
    %6 = arith.mulf %5, %4 : vector<16x128xf32>
    %cst_4 = arith.constant 1.000000e+00 : f32
    %7 = vector.broadcast %cst_4 : f32 to vector<16x128xf32>
    %8 = arith.subf %7, %6 : vector<16x128xf32>
    %9 = arith.mulf %8, %3 : vector<16x128xf32>
    %10 = math.absf %3 : vector<16x128xf32>
    %cst_5 = arith.constant 0.000000e+00 : f32
    %11 = vector.broadcast %cst_5 : f32 to vector<16x128xf32>
    %12 = arith.subf %11, %10 : vector<16x128xf32>
    %13 = math.exp %12 : vector<16x128xf32>
    %cst_6 = arith.constant 0.000000e+00 : f32
    %14 = vector.broadcast %cst_6 : f32 to vector<16x128xf32>
    %15 = arith.maximumf %9, %14 : vector<16x128xf32>
    %16 = math.log1p %13 : vector<16x128xf32>
    %17 = arith.addf %15, %16 : vector<16x128xf32>
    %cst_7 = arith.constant 0.000000e+00 : f32
    %18 = vector.broadcast %cst_7 : f32 to vector<16x128xf32>
    %19 = arith.cmpf ogt, %9, %18 : vector<16x128xf32>
    %cst_8 = arith.constant 1.000000e+00 : f32
    %20 = vector.broadcast %cst_8 : f32 to vector<16x128xf32>
    %21 = arith.select %19, %13, %20 : vector<16x128xi1>, vector<16x128xf32>
    %cst_9 = arith.constant 1.000000e+00 : f32
    %22 = vector.broadcast %cst_9 : f32 to vector<16x128xf32>
    %23 = arith.addf %22, %13 : vector<16x128xf32>
    %24 = arith.divf %21, %23 : vector<16x128xf32>
    %cst_10 = arith.constant 5.000000e-01 : f32
    %25 = vector.broadcast %cst_10 : f32 to vector<16x128xf32>
    %26 = arith.cmpf ogt, %4, %25 : vector<16x128xf32>
    %cst_11 = arith.constant 7.500000e-01 : f32
    %cst_12 = arith.constant 2.500000e-01 : f32
    %27 = vector.broadcast %cst_11 : f32 to vector<16x128xf32>
    %28 = vector.broadcast %cst_12 : f32 to vector<16x128xf32>
    %29 = arith.select %26, %27, %28 : vector<16x128xi1>, vector<16x128xf32>
    %cst_13 = arith.constant 1.000000e+00 : f32
    %30 = vector.broadcast %cst_13 : f32 to vector<16x128xf32>
    %31 = arith.subf %30, %24 : vector<16x128xf32>
    %32 = arith.mulf %31, %31 : vector<16x128xf32>
    %33 = arith.mulf %29, %32 : vector<16x128xf32>
    %34 = arith.mulf %33, %17 : vector<16x128xf32>
    %35 = vector.shape_cast %34 : vector<16x128xf32> to vector<2x8x128xf32>
    %cst_14 = arith.constant dense<0.000000e+00> : vector<8x128xf32>
    %36 = vector.multi_reduction <add>, %35, %cst_14 [0] : vector<2x8x128xf32> to vector<8x128xf32>
    %c0_15 = arith.constant 0 : index
    %c0_16 = arith.constant 0 : index
    %37 = vector.load %arg5[%c0_15, %c0_16] : memref<8x128xf32, #tpu.memory_space<vmem>>, vector<8x128xf32>
    %38 = arith.addf %37, %36 : vector<8x128xf32>
    %c0_17 = arith.constant 0 : index
    %c0_18 = arith.constant 0 : index
    %39 = vector.load %arg5[%c0_17, %c0_18] : memref<8x128xf32, #tpu.memory_space<vmem>>, vector<8x128xf32>
    tpu.vector_store %arg5[%c0_17, %c0_18], %38 {strides = array<i32>} : memref<8x128xf32, #tpu.memory_space<vmem>>, vector<8x128xf32>,
    %c0_i32_19 = arith.constant 0 : i32
    %40 = arith.cmpi eq, %arg1, %c0_i32_19 : i32
    %41 = arith.extui %40 : i1 to i32
    %c0_i32_20 = arith.constant 0 : i32
    %42 = arith.cmpi ne, %41, %c0_i32_20 : i32
    scf.if %42 {
      %c0_21 = arith.constant 0 : index
      %c0_22 = arith.constant 0 : index
      %43 = vector.load %arg5[%c0_21, %c0_22] : memref<8x128xf32, #tpu.memory_space<vmem>>, vector<8x128xf32>
      %cst_23 = arith.constant dense<0.000000e+00> : vector<128xf32>
      %44 = vector.multi_reduction <add>, %43, %cst_23 [0] : vector<8x128xf32> to vector<128xf32>
      %45 = vector.shape_cast %44 : vector<128xf32> to vector<1x128xf32>
      %c0_24 = arith.constant 0 : index
      %c0_25 = arith.constant 0 : index
      %46 = vector.load %arg4[%c0_24, %c0_25] : memref<1x128xf32, #tpu.memory_space<vmem>>, vector<1x128xf32>
      tpu.vector_store %arg4[%c0_24, %c0_25], %45 {strides = array<i32>} : memref<1x128xf32, #tpu.memory_space<vmem>>, vector<1x128xf32>,
    } else {
    }
    return
  }
  func.func @transform_0(%arg0: i32, %arg1: i32) -> (i32, i32) {
    %c1_i32 = arith.constant 1 : i32
    %0 = arith.muli %arg0, %c1_i32 : i32
    %1 = arith.addi %0, %arg1 : i32
    %c0_i32 = arith.constant 0 : i32
    %c0_i32_0 = arith.constant 0 : i32
    return %1, %c0_i32 : i32, i32
  }
  func.func @transform_1(%arg0: i32, %arg1: i32) -> (i32, i32) {
    %c1_i32 = arith.constant 1 : i32
    %0 = arith.muli %arg0, %c1_i32 : i32
    %1 = arith.addi %0, %arg1 : i32
    %c0_i32 = arith.constant 0 : i32
    %c0_i32_0 = arith.constant 0 : i32
    return %1, %c0_i32 : i32, i32
  }
  func.func @transform_2(%arg0: i32, %arg1: i32) -> (i32, i32) {
    %c0_i32 = arith.constant 0 : i32
    %c0_i32_0 = arith.constant 0 : i32
    return %arg0, %c0_i32 : i32, i32
  }
}

</mosaic_0001>

<llo_original>
// kernel: tpu_custom_call.1
$region0: #{tpu_custom_call.1}
  #allocation0 [shape = 'u32[]', space=smem, size = 0x4, offset = 0x4, fixed_abs, tag = 'smem constant byte address 0x4 - core index']
  #allocation1 [shape = 'u32[144,128]{1,0:T(1,128)}', space=vmem, size = 0x12000, scoped, tag = 'internal scratch']
  #allocation2 [shape = 'f32[8,128]{1,0:T(8,128)}', space=vmem, size = 0x1000, scoped, tag = 'scratch operand']
  %s0 = inlined_call_operand.hbm [shape: f32[16,128], index: 0, kind: input, shape index: {}]
  %s1 = inlined_call_operand.hbm [shape: f32[16,128], index: 1, kind: input, shape index: {}]
  %s2 = inlined_call_operand.hbm [shape: f32[1,128], index: 2, kind: output, shape index: {}]
  %s3 = sld [smem:[#allocation0]]
  $region34: #{tpu_custom_call.1} parent=0
    _
  %s5 = ssub.s32 1, %s3
  %s6 = scalar_select 0, %s5, %s3
  $region1: #{tpu_custom_call.1} parent=0
    #allocation3 [shape = 'u8[8192]{0}', space=vmem, size = 0x2000, scoped, tag = 'input window, operand 0, single buffered']
    #allocation4 [shape = 's32[1]{0}', space=sflag, size = 0x4, scoped, tag = 'scoped memory for tpu_custom_call.1']
    #allocation5 [shape = 's32[1]{0}', space=sflag, size = 0x4, scoped, tag = 'scoped memory for tpu_custom_call.1']
    #allocation6 [shape = 'u8[8192]{0}', space=vmem, size = 0x2000, scoped, tag = 'input window, operand 1, single buffered']
    #allocation7 [shape = 's32[1]{0}', space=sflag, size = 0x4, scoped, tag = 'scoped memory for tpu_custom_call.1']
    #allocation8 [shape = 'u8[512]{0}', space=vmem, size = 0x400, scoped, tag = 'output window, operand 0, single buffered']
    %7 = vsyncpa [#allocation4], 0
    %8 = vsyncpa [#allocation7], 0
    %9 = vsyncpa [#allocation5], 0
    // Predicated region
    $region2: #{tpu_custom_call.1} parent=1 // pred_check
      _
    $region3: #{tpu_custom_call.1} parent=1 // pred_check_branch
      %11 = sbr.rel (0) target = $region5
    $region4: #{tpu_custom_call.1} parent=1 // pred_region
      %s12 = sadd.s32 0, 0
      %s13 = smul.u32 2, %s12
      %s15 = ssub.s32 256, 256
      %16 = vsyncadd [#allocation4], %s15
      %s17 = smul.addr %s13, 128
      %s18 = scalar_lea.hbm %s0, %s17
      %s19 = sshll.u32 [#allocation3], 4
      %s20 = int_to_ptr.vmem [resolvable:$true] %s19
      %25 = dma.hbm_to_vmem [thread:$0]  %s18, 256, %s20, [#allocation4], 128, 128, 8
    $region5: #{tpu_custom_call.1} parent=1 // pred_fallthru
      _
    // Predicated region
    $region6: #{tpu_custom_call.1} parent=1 // pred_check
      _
    $region7: #{tpu_custom_call.1} parent=1 // pred_check_branch
      %27 = sbr.rel (0) target = $region9
    $region8: #{tpu_custom_call.1} parent=1 // pred_region
      %s28 = sadd.s32 0, 0
      %s29 = smul.u32 2, %s28
      %s31 = ssub.s32 256, 256
      %32 = vsyncadd [#allocation7], %s31
      %s33 = smul.addr %s29, 128
      %s34 = scalar_lea.hbm %s1, %s33
      %s35 = sshll.u32 [#allocation6], 4
      %s36 = int_to_ptr.vmem [resolvable:$true] %s35
      %41 = dma.hbm_to_vmem [thread:$0]  %s34, 256, %s36, [#allocation7], 128, 128, 8
    $region9: #{tpu_custom_call.1} parent=1 // pred_fallthru
      _
    // Predicated region
    $region10: #{tpu_custom_call.1} parent=1 // pred_check
      _
    $region11: #{tpu_custom_call.1} parent=1 // pred_check_branch
      %43 = sbr.rel (0) target = $region13
    $region12: #{tpu_custom_call.1} parent=1 // pred_region
      %44 = dma.done [#allocation4], 256
    $region13: #{tpu_custom_call.1} parent=1 // pred_fallthru
      _
    // Predicated region
    $region14: #{tpu_custom_call.1} parent=1 // pred_check
      _
    $region15: #{tpu_custom_call.1} parent=1 // pred_check_branch
      %46 = sbr.rel (0) target = $region17
    $region16: #{tpu_custom_call.1} parent=1 // pred_region
      %47 = dma.done [#allocation7], 256
    $region17: #{tpu_custom_call.1} parent=1 // pred_fallthru
      _
    %s48 = sadd.s32 0, 0
    %s49 = smul.u32 2, %s48
    %s50 = sadd.s32 0, 0
    %s51 = smul.u32 2, %s50
    %p52 = scmp.eq.s32.totalorder 0, 0
    // Predicated region
    $region18: #{tpu_custom_call.1} parent=1 // pred_check
      %p53 = pneg %p52
    $region19: #{tpu_custom_call.1} parent=1 // pred_check_branch
      %55 = sbr.rel (%p53) target = $region21
    $region20: #{tpu_custom_call.1} parent=1 // pred_region
      %56 = vst [vmem:[#allocation2] sm:$0xff] 0.0
    $region21: #{tpu_custom_call.1} parent=1 // pred_fallthru
      _
    %v57 = vld [vmem:[#allocation3] sm:$0xff]
    %v58 = vld [vmem:[#allocation3 + $0x8] sm:$0xff]
    %v59 = vld [vmem:[#allocation6] sm:$0xff]
    %v60 = vld [vmem:[#allocation6 + $0x8] sm:$0xff]
    %v61 = vmul.f32 %v59, 2.0
    %v62 = vmul.f32 %v60, 2.0
    %v63 = vsub.f32 1.0, %v61
    %v64 = vsub.f32 1.0, %v62
    %v65 = vmul.f32 %v63, %v57
    %v66 = vmul.f32 %v64, %v58
    %v67 = vand.u32 2147483647, %v57
    %v68 = vand.u32 2147483647, %v58
    %v69 = vsub.f32 0.0, %v67
    %v70 = vsub.f32 0.0, %v68
    %v71 = vmul.f32 %v69, 1.442695
    %v72 = vpow.pop %v71
    %v73 = vmul.f32 %v70, 1.442695
    %v74 = vpow.pop %v73
    %v75 = vmax.f32 %v65, 0.0
    %v76 = vmax.f32 %v66, 0.0
    %v77 = vadd.f32 %v72, 1.0
    %v78 = vlog2.pop %v77
    %v79 = vmul.f32 %v78, 0.6931472
    %v80 = vmul.f32 -0.5, %v72
    %v81 = vadd.f32 %v80, 1.0
    %v82 = vmul.f32 %v81, %v72
    %v83 = vand.u32 2147483647, %v72
    %vm84 = vcmp.lt.f32.partialorder %v83, 0.0004427343
    %v85 = vsel %vm84, %v82, %v79
    %v86 = vadd.f32 %v74, 1.0
    %v87 = vlog2.pop %v86
    %v88 = vmul.f32 %v87, 0.6931472
    %v89 = vmul.f32 -0.5, %v74
    %v90 = vadd.f32 %v89, 1.0
    %v91 = vmul.f32 %v90, %v74
    %v92 = vand.u32 2147483647, %v74
    %vm93 = vcmp.lt.f32.partialorder %v92, 0.0004427343
    %v94 = vsel %vm93, %v91, %v88
    %v95 = vadd.f32 %v75, %v85
    %v96 = vadd.f32 %v76, %v94
    %vm97 = vcmp.gt.f32.partialorder %v65, 0.0
    %vm98 = vcmp.gt.f32.partialorder %v66, 0.0
    %v99 = vsel %vm97, %v72, 1.0
    %v100 = vsel %vm98, %v74, 1.0
    %v101 = vadd.f32 %v72, 1.0
    %v102 = vadd.f32 %v74, 1.0
    %v103 = vrcp.pop %v101
    %v104 = vmul.f32 %v99, %v103
    %v105 = vrcp.pop %v102
    %v106 = vmul.f32 %v100, %v105
    %vm107 = vcmp.gt.f32.partialorder %v59, 0.5
    %vm108 = vcmp.gt.f32.partialorder %v60, 0.5
    %v109 = vsel %vm107, 0.75, 0.25
    %v110 = vsel %vm108, 0.75, 0.25
    %v111 = vsub.f32 1.0, %v104
    %v112 = vsub.f32 1.0, %v106
    %v113 = vmul.f32 %v111, %v111
    %v114 = vmul.f32 %v112, %v112
    %v115 = vmul.f32 %v109, %v113
    %v116 = vmul.f32 %v110, %v114
    %v117 = vmul.f32 %v115, %v95
    %v118 = vmul.f32 %v116, %v96
    %v119 = vadd.f32 %v117, %v118
    %v120 = vld [vmem:[#allocation2] sm:$0xff]
    %v121 = vadd.f32 %v120, %v119
    %122 = vst [vmem:[#allocation2] sm:$0xff] %v121
    // Predicated region
    $region22: #{tpu_custom_call.1} parent=1 // pred_check
      %p123 = pneg %p52
    $region23: #{tpu_custom_call.1} parent=1 // pred_check_branch
      %125 = sbr.rel (%p123) target = $region25
    $region24: #{tpu_custom_call.1} parent=1 // pred_region
      %v126 = vld [vmem:[#allocation2] sm:$0xff]
      %v127 = vrot.slane %v126, 4
      %v128 = vadd.f32 %v126, %v127
      %v129 = vrot.slane %v128, 2
      %v130 = vadd.f32 %v128, %v129
      %v131 = vrot.slane %v130, 1
      %v132 = vadd.f32 %v130, %v131
      %133 = vst [vmem:[#allocation8] sm:$0x1] %v132
    $region25: #{tpu_custom_call.1} parent=1 // pred_fallthru
      _
    // Predicated region
    $region26: #{tpu_custom_call.1} parent=1 // pred_check
      _
    $region27: #{tpu_custom_call.1} parent=1 // pred_check_branch
      %135 = sbr.rel (0) target = $region29
    $region28: #{tpu_custom_call.1} parent=1 // pred_region
      %s137 = ssub.s32 16, 16
      %138 = vsyncadd [#allocation5], %s137
      %s140 = sshll.u32 [#allocation8], 4
      %s141 = int_to_ptr.vmem [resolvable:$true] %s140
      %143 = dma.vmem_to_hbm [thread:$0]  %s141, 16, %s2, [#allocation5]
    $region29: #{tpu_custom_call.1} parent=1 // pred_fallthru
      _
    // Predicated region
    $region30: #{tpu_custom_call.1} parent=1 // pred_check
      _
    $region31: #{tpu_custom_call.1} parent=1 // pred_check_branch
      %145 = sbr.rel (0) target = $region33
    $region32: #{tpu_custom_call.1} parent=1 // pred_region
      %146 = dma.done [#allocation5], 16
    $region33: #{tpu_custom_call.1} parent=1 // pred_fallthru
      _
    %147 = vsyncpa [#allocation4], 1
    %148 = vsyncpa [#allocation7], 1
    %149 = vsyncpa [#allocation5], 1

</llo_original>
